<compile_context>
chip_gen: v5e
topology: v5e:2x2
jax: 0.10.0
libtpu: 0.0.40
codegen_flags: <defaults>
</compile_context>

<pallas_src>
import jax
import jax.numpy as jnp
from jax.experimental import pallas as pl
from jax.experimental.pallas import tpu as pltpu


def _swish_beta_kernel(beta_ref, x_ref, o_ref):
    # beta_ref: (1,) scalar in SMEM; x_ref/o_ref: (tile_rows, lane) VMEM tiles.
    half_beta = 0.5 * beta_ref[0]
    x = x_ref[...].astype(jnp.float32)
    # 2*x*sigmoid(beta*x) == x * (1 + tanh(0.5*beta*x)) == x + x*tanh(0.5*beta*x)
    y = x + x * jnp.tanh(half_beta * x)
    o_ref[...] = y.astype(o_ref.dtype)


def pallas_swish_beta(
    x: jax.Array,
    beta: jax.Array,
    *,
    max_lane: int = 512,
    target_block_bytes: int = 4 * 1024 * 1024,
) -> jax.Array:
    """SwishBeta: 2 * x * sigmoid(beta * x), elementwise, via a Pallas TPU kernel."""
    if max_lane % 128 != 0 or max_lane < 128:
        raise ValueError(f"max_lane must be a positive multiple of 128, got {max_lane}")

    orig_shape = x.shape
    orig_dtype = x.dtype
    n = x.size
    itemsize = jnp.dtype(orig_dtype).itemsize

    beta = beta.reshape((1,)).astype(jnp.float32)

    flat = x.reshape(-1)  # pure reshape: free (no data movement)

    # Pick the widest lane width (multiple of 128) that divides n exactly so we
    # avoid any wrapper-side padding pass in the common case.
    lane = 0
    for cand in range(max_lane, 127, -128):
        if n % cand == 0:
            lane = cand
            break

    pad = 0
    if lane == 0:
        # TODO(synk): ragged n (not a multiple of 128) still uses a tail pad +
        # slice; a fully traffic-optimal version would keep the flat buffer in
        # HBM (memory_space=pl.ANY) and mask the tail store in-kernel.
        lane = max_lane
        pad = (-n) % lane
        flat = jnp.pad(flat, (0, pad))

    rows = flat.size // lane
    x2d = flat.reshape(rows, lane)

    # Byte-budgeted row tile, rounded to the dtype sublane multiple
    # (8 for f32, 16 for bf16, 32 for int8/fp8).
    sub = max(8, 32 // itemsize)
    budget_rows = max(sub, (target_block_bytes // (lane * itemsize)) // sub * sub)

    if rows <= budget_rows:
        if rows >= 2 * sub:
            # Split into >= 2 blocks so the "parallel" grid axis can shard
            # across both TensorCores on v7x (v5e/v6e: harmless).
            half = (rows + 1) // 2
            tile_rows = ((half + sub - 1) // sub) * sub
        else:
            tile_rows = rows  # full-dim block (always legal), single grid step
    else:
        tile_rows = budget_rows

    grid = (pl.cdiv(rows, tile_rows),)

    cost = pl.CostEstimate(
        flops=4 * n,
        transcendentals=n,
        bytes_accessed=2 * n * itemsize,
    )

    out2d = pl.pallas_call(
        _swish_beta_kernel,
        out_shape=jax.ShapeDtypeStruct((rows, lane), orig_dtype),
        grid=grid,
        in_specs=[
            pl.BlockSpec(memory_space=pltpu.MemorySpace.SMEM),     # beta (1,)
            pl.BlockSpec((tile_rows, lane), lambda i: (i, 0)),     # x tile
        ],
        out_specs=pl.BlockSpec((tile_rows, lane), lambda i: (i, 0)),
        compiler_params=pltpu.CompilerParams(
            dimension_semantics=("parallel",),
            vmem_limit_bytes=32 * 1024 * 1024,
        ),
        cost_estimate=cost,
    )(beta, x2d)

    out_flat = out2d.reshape(-1)
    if pad:
        out_flat = out_flat[:n]
    return out_flat.reshape(orig_shape)


if __name__ == "__main__":
    key = jax.random.PRNGKey(0)
    kx, kb = jax.random.split(key)

    # Matches the PyTorch module: NCHW activation + scalar learnable beta.
    x = jax.random.normal(kx, (2, 4, 16, 16), dtype=jnp.float32)
    beta = jax.random.normal(kb, (1,), dtype=jnp.float32)

    y = jax.block_until_ready(pallas_swish_beta(x, beta))
    y_ref = 2.0 * x * jax.nn.sigmoid(beta[0] * x)
    assert y.shape == x.shape and y.dtype == x.dtype
    assert jnp.allclose(y, y_ref, atol=1e-5, rtol=1e-5)

    # Exercise the ragged (n % 128 != 0) fallback path too.
    x2 = jax.random.normal(kx, (3, 5, 7, 11), dtype=jnp.float32)
    y2 = jax.block_until_ready(pallas_swish_beta(x2, beta))
    y2_ref = 2.0 * x2 * jax.nn.sigmoid(beta[0] * x2)
    assert y2.shape == x2.shape and y2.dtype == x2.dtype
    assert jnp.allclose(y2, y2_ref, atol=1e-5, rtol=1e-5)

    print("KERNEL_OK")
</pallas_src>

<mosaic_0001>
module attributes {stable_mosaic.version = 11 : i64} {
  func.func @_swish_beta_kernel(%arg0: i32, %arg1: memref<1xf32, #tpu.memory_space<smem>>, %arg2: memref<4x512xf32, #tpu.memory_space<vmem>>, %arg3: memref<4x512xf32, #tpu.memory_space<vmem>>) attributes {dimension_semantics = [#tpu.dimension_semantics<parallel>], iteration_bounds = array<i64: 1>, scalar_prefetch = 0 : i64, scratch_operands = 0 : i64, tpu.core_type = #tpu.core_type<tc>, window_params = [{transform_indices = @transform_0, window_bounds = array<i64: 1>}, {transform_indices = @transform_1, window_bounds = array<i64: 4, 512>}, {transform_indices = @transform_2, window_bounds = array<i64: 4, 512>}]} {
    %c0 = arith.constant 0 : index
    %0 = memref.load %arg1[%c0] : memref<1xf32, #tpu.memory_space<smem>>
    %cst = arith.constant 5.000000e-01 : f32
    %1 = arith.mulf %cst, %0 : f32
    %c0_0 = arith.constant 0 : index
    %c0_1 = arith.constant 0 : index
    %2 = vector.load %arg2[%c0_0, %c0_1] : memref<4x512xf32, #tpu.memory_space<vmem>>, vector<4x512xf32>
    %3 = vector.broadcast %1 : f32 to vector<4x512xf32>
    %4 = arith.mulf %3, %2 : vector<4x512xf32>
    %5 = math.tanh %4 : vector<4x512xf32>
    %6 = arith.mulf %2, %5 : vector<4x512xf32>
    %7 = arith.addf %2, %6 : vector<4x512xf32>
    %c0_2 = arith.constant 0 : index
    %c0_3 = arith.constant 0 : index
    %8 = vector.load %arg3[%c0_2, %c0_3] : memref<4x512xf32, #tpu.memory_space<vmem>>, vector<4x512xf32>
    tpu.vector_store %arg3[%c0_2, %c0_3], %7 {strides = array<i32>} : memref<4x512xf32, #tpu.memory_space<vmem>>, vector<4x512xf32>,
    return
  }
  func.func @transform_0(%arg0: i32) -> i32 {
    %c0_i32 = arith.constant 0 : i32
    %c0_i32_0 = arith.constant 0 : i32
    return %c0_i32 : i32
  }
  func.func @transform_1(%arg0: i32) -> (i32, i32) {
    %c0_i32 = arith.constant 0 : i32
    %c0_i32_0 = arith.constant 0 : i32
    return %arg0, %c0_i32 : i32, i32
  }
  func.func @transform_2(%arg0: i32) -> (i32, i32) {
    %c0_i32 = arith.constant 0 : i32
    %c0_i32_0 = arith.constant 0 : i32
    return %arg0, %c0_i32 : i32, i32
  }
}

</mosaic_0001>

<llo_original>
// kernel: tpu_custom_call.1
$region0: #{tpu_custom_call.1}
  #allocation0 [shape = 'u32[]', space=smem, size = 0x4, offset = 0x4, fixed_abs, tag = 'smem constant byte address 0x4 - core index']
  #allocation1 [shape = 'u32[72,128]{1,0:T(1,128)}', space=vmem, size = 0x9000, scoped, tag = 'internal scratch']
  #allocation2 [shape = 'f32[1]{0:T(128)S(6)}', space=smem, size = 0x200, scoped, tag = 'scoped memory for tpu_custom_call.1']
  %s0 = inlined_call_operand.<no memory space> [shape: f32[1], index: 0, kind: input, shape index: {}]
  %s1 = inlined_call_operand.hbm [shape: f32[4,512], index: 1, kind: input, shape index: {}]
  %s2 = inlined_call_operand.hbm [shape: f32[4,512], index: 2, kind: output, shape index: {}]
  %s3 = sld [smem:[#allocation0]]
  $region22: #{tpu_custom_call.1} parent=0
    _
  %s5 = ssub.s32 1, %s3
  %s6 = scalar_select 0, %s5, %s3
  %7 = sst [smem:[#allocation2]] %s0
  $region1: #{tpu_custom_call.1} parent=0
    #allocation3 [shape = 'u8[8192]{0}', space=vmem, size = 0x2000, scoped, tag = 'input window, operand 1, single buffered']
    #allocation4 [shape = 's32[1]{0}', space=sflag, size = 0x4, scoped, tag = 'scoped memory for tpu_custom_call.1']
    #allocation5 [shape = 's32[1]{0}', space=sflag, size = 0x4, scoped, tag = 'scoped memory for tpu_custom_call.1']
    #allocation6 [shape = 'u8[8192]{0}', space=vmem, size = 0x2000, scoped, tag = 'output window, operand 0, single buffered']
    %8 = vsyncpa [#allocation4], 0
    %9 = vsyncpa [#allocation5], 0
    // Predicated region
    $region2: #{tpu_custom_call.1} parent=1 // pred_check
      _
    $region3: #{tpu_custom_call.1} parent=1 // pred_check_branch
      %11 = sbr.rel (0) target = $region5
    $region4: #{tpu_custom_call.1} parent=1 // pred_region
      _
    $region5: #{tpu_custom_call.1} parent=1 // pred_fallthru
      _
    // Predicated region
    $region6: #{tpu_custom_call.1} parent=1 // pred_check
      _
    $region7: #{tpu_custom_call.1} parent=1 // pred_check_branch
      %13 = sbr.rel (0) target = $region9
    $region8: #{tpu_custom_call.1} parent=1 // pred_region
      %15 = vsyncadd [#allocation4], 0
      %s17 = sshll.u32 %s1, 4
      %s18 = int_to_ptr.hbm [resolvable:$true] %s17
      %s19 = sshll.u32 [#allocation3], 4
      %s20 = int_to_ptr.vmem [resolvable:$true] %s19
      %22 = dma.hbm_to_vmem [thread:$0]  %s18, 256, %s20, [#allocation4]
    $region9: #{tpu_custom_call.1} parent=1 // pred_fallthru
      _
    // Predicated region
    $region10: #{tpu_custom_call.1} parent=1 // pred_check
      _
    $region11: #{tpu_custom_call.1} parent=1 // pred_check_branch
      %24 = sbr.rel (0) target = $region13
    $region12: #{tpu_custom_call.1} parent=1 // pred_region
      %26 = dma.done [#allocation4], 256
    $region13: #{tpu_custom_call.1} parent=1 // pred_fallthru
      _
    %s27 = sld [smem:[#allocation2]]
    %s28 = smul.f32 %s27, 0.5
    %v29 = vld [vmem:[#allocation3] sm:$0xff]
    %v30 = vld [vmem:[#allocation3 + $0x8] sm:$0xff]
    %v31 = vstv %s28
    %v32 = vmul.f32 %v31, %v29
    %v33 = vmul.f32 %v31, %v30
    %v34 = vtanh.pop %v32
    %v35 = vtanh.pop %v33
    %v36 = vmul.f32 %v29, %v34
    %v37 = vmul.f32 %v30, %v35
    %v38 = vadd.f32 %v29, %v36
    %v39 = vadd.f32 %v30, %v37
    %40 = vst [vmem:[#allocation6] sm:$0xff] %v38
    %41 = vst [vmem:[#allocation6 + $0x8] sm:$0xff] %v39
    // Predicated region
    $region14: #{tpu_custom_call.1} parent=1 // pred_check
      _
    $region15: #{tpu_custom_call.1} parent=1 // pred_check_branch
      %43 = sbr.rel (0) target = $region17
    $region16: #{tpu_custom_call.1} parent=1 // pred_region
      %45 = vsyncadd [#allocation5], 0
      %s47 = sshll.u32 [#allocation6], 4
      %s48 = int_to_ptr.vmem [resolvable:$true] %s47
      %s49 = sshll.u32 %s2, 4
      %s50 = int_to_ptr.hbm [resolvable:$true] %s49
      %52 = dma.vmem_to_hbm [thread:$0]  %s48, 256, %s50, [#allocation5]
    $region17: #{tpu_custom_call.1} parent=1 // pred_fallthru
      _
    // Predicated region
    $region18: #{tpu_custom_call.1} parent=1 // pred_check
      _
    $region19: #{tpu_custom_call.1} parent=1 // pred_check_branch
      %54 = sbr.rel (0) target = $region21
    $region20: #{tpu_custom_call.1} parent=1 // pred_region
      %56 = dma.done [#allocation5], 256
    $region21: #{tpu_custom_call.1} parent=1 // pred_fallthru
      _
    %57 = vsyncpa [#allocation4], 1
    %58 = vsyncpa [#allocation5], 1

</llo_original>
